<compile_context>
chip_gen: v7x
topology: tpu7x:2x2x1
jax: 0.10.0
libtpu: 0.0.40
codegen_flags: <defaults>
</compile_context>

<pallas_src>
import functools

import jax
import jax.numpy as jnp
from jax.experimental import pallas as pl
from jax.experimental.pallas import tpu as pltpu

LANE = 128


def _round_up(n, m):
    return ((n + m - 1) // m) * m


def _vmem_bytes_2d(shape, dtype):
    """VMEM footprint of a 2-D tile after (sublane, lane) padding."""
    elt = jnp.dtype(dtype).itemsize
    sublane = {4: 8, 2: 16, 1: 32}.get(elt, 8)
    return _round_up(shape[0], sublane) * _round_up(shape[1], LANE) * elt


# -----------------------------------------------------------------------------
# Kernel: one batch tile (TB lanes) through the whole MLP, batch-on-lanes.
#   xT_ref : (F,  TB)   streamed input tile (f32 or bf16)
#   w1_ref : (H1, F)    b1_ref : (H1, 1)
#   w2_ref : (H2, H1)   b2_ref : (H2, 1)
#   w3_ref : (H2, 1) if head_is_reduce else (OUT, H2)
#   b3_ref : (OUT, 1)
#   o_ref  : (OUT, TB)  lane-dense output row(s)
# -----------------------------------------------------------------------------
def _value_net_kernel(xT_ref, w1_ref, b1_ref, w2_ref, b2_ref, w3_ref, b3_ref,
                      o_ref, *, head_is_reduce):
    xT = xT_ref[...].astype(jnp.float32)                       # (F, TB)

    # Layer 1: Linear + ReLU (Dropout -> identity at inference).
    h1 = jnp.dot(w1_ref[...], xT, preferred_element_type=jnp.float32)
    h1 = jnp.maximum(h1 + b1_ref[...], 0.0)                    # (H1, TB)

    # Layer 2: Linear + ReLU (Dropout -> identity at inference).
    h2 = jnp.dot(w2_ref[...], h1, preferred_element_type=jnp.float32)
    h2 = jnp.maximum(h2 + b2_ref[...], 0.0)                    # (H2, TB)

    # Output head + tanh.
    if head_is_reduce:
        # out_size == 1: VPU broadcast-multiply + XLU sublane reduce; an M=1
        # MXU pass would be nearly empty and the MXU is not the binding unit.
        y = jnp.sum(h2 * w3_ref[...], axis=0, keepdims=True)   # (1, TB)
    else:
        y = jnp.dot(w3_ref[...], h2, preferred_element_type=jnp.float32)
    o_ref[...] = jnp.tanh(y + b3_ref[...]).astype(o_ref.dtype)


# -----------------------------------------------------------------------------
# Wrapper: pads the batch to a multiple of the (lane-axis) batch tile, builds
# the 1-D grid, and transposes the lane-dense result back to [B, out_size].
# -----------------------------------------------------------------------------
@functools.partial(jax.jit, static_argnames=("block_b", "stream_dtype"))
def value_network_forward(x, w1, b1, w2, b2, w3, b3, *, block_b=2048,
                          stream_dtype=jnp.float32):
    """Pallas forward pass of ValueNetwork.

    x:  [B, input_size] float32
    wK: [out_K, in_K]   float32   (PyTorch nn.Linear.weight layout)
    bK: [out_K]         float32   (PyTorch nn.Linear.bias layout)
    Returns [B, output_size] float32.
    """
    B, F = x.shape
    H1 = w1.shape[0]
    H2 = w2.shape[0]
    out_size = w3.shape[0]

    # Batch tile on the lane axis: multiple of 128, capped at block_b, and
    # capped again so the grid has >=2 steps when the batch allows it
    # (v7x has 2 TensorCores; a single-step grid leaves one idle).
    b_ceil = _round_up(B, LANE)
    tb = max(LANE, (min(block_b, b_ceil) // LANE) * LANE)
    if b_ceil >= 2 * LANE:
        tb = min(tb, max(LANE, (b_ceil // (2 * LANE)) * LANE))
    b_pad = _round_up(B, tb)
    nb = b_pad // tb

    # Batch-on-lanes: stream x as [F, B_pad] (no lane padding for small F).
    xT = x.astype(jnp.float32)
    if b_pad != B:
        xT = jnp.pad(xT, ((0, b_pad - B), (0, 0)))
    xT = xT.T
    if jnp.dtype(stream_dtype) != jnp.dtype(jnp.float32):
        xT = xT.astype(stream_dtype)

    head_is_reduce = (out_size == 1)
    w3_arg = w3.T if head_is_reduce else w3     # (H2, 1) column / (OUT, H2)
    b1c = b1.reshape(H1, 1)
    b2c = b2.reshape(H2, 1)
    b3c = b3.reshape(out_size, 1)

    kernel = functools.partial(_value_net_kernel, head_is_reduce=head_is_reduce)

    # Weights/biases: full-array block, constant index map (VMEM-resident
    # across grid steps).
    def const_spec(a):
        return pl.BlockSpec(a.shape, lambda i: (0,) * a.ndim)

    # Honest VMEM budget: (sublane, lane)-padded tiles; x/out tiles and the
    # constant-index weights are all double-buffered by the auto-pipeliner.
    w_args = (w1, b1c, w2, b2c, w3_arg, b3c)
    w_bytes = sum(_vmem_bytes_2d(a.shape, a.dtype) for a in w_args)
    io_bytes = (_vmem_bytes_2d((F, tb), stream_dtype)
                + _vmem_bytes_2d((out_size, tb), jnp.float32))
    vmem_limit = int(2 * (w_bytes + io_bytes) + (16 << 20))

    cost = pl.CostEstimate(
        flops=int(2 * b_pad * (F * H1 + H1 * H2 + H2 * out_size)),
        transcendentals=int(b_pad * out_size),
        bytes_accessed=int(b_pad * F * jnp.dtype(stream_dtype).itemsize
                           + b_pad * out_size * 4
                           + sum(int(a.size) for a in w_args) * 4),
    )

    outT = pl.pallas_call(
        kernel,
        out_shape=jax.ShapeDtypeStruct((out_size, b_pad), jnp.float32),
        grid=(nb,),
        in_specs=[
            pl.BlockSpec((F, tb), lambda i: (0, i)),   # x tile: lanes = batch
            const_spec(w1), const_spec(b1c),
            const_spec(w2), const_spec(b2c),
            const_spec(w3_arg), const_spec(b3c),
        ],
        out_specs=pl.BlockSpec((out_size, tb), lambda i: (0, i)),  # lane-dense
        compiler_params=pltpu.CompilerParams(
            dimension_semantics=("parallel",),
            vmem_limit_bytes=vmem_limit,
        ),
        cost_estimate=cost,
    )(xT, w1, b1c, w2, b2c, w3_arg, b3c)

    out = outT.T                                   # (b_pad, out_size)
    return out[:B] if b_pad != B else out


# -----------------------------------------------------------------------------
# Deterministic parameter init mimicking PyTorch nn.Linear (U(-1/sqrt(fan_in)))
# in PyTorch layout: W [out, in], b [out].
# -----------------------------------------------------------------------------
def init_params(key, input_size, hidden_sizes, output_size):
    sizes = [input_size] + list(hidden_sizes) + [output_size]
    params = []
    for i in range(len(sizes) - 1):
        fan_in, fan_out = sizes[i], sizes[i + 1]
        key, kw, kb = jax.random.split(key, 3)
        bound = 1.0 / jnp.sqrt(jnp.float32(fan_in))
        w = jax.random.uniform(kw, (fan_out, fan_in), jnp.float32,
                               minval=-bound, maxval=bound)
        b = jax.random.uniform(kb, (fan_out,), jnp.float32,
                               minval=-bound, maxval=bound)
        params.extend([w, b])
    return params


def reference_forward(x, w1, b1, w2, b2, w3, b3):
    dot = functools.partial(jnp.dot, precision=jax.lax.Precision.HIGHEST)
    h1 = jnp.maximum(dot(x, w1.T) + b1, 0.0)
    h2 = jnp.maximum(dot(h1, w2.T) + b2, 0.0)
    return jnp.tanh(dot(h2, w3.T) + b3)


if __name__ == "__main__":
    # Config consistent with the module's __init__.
    network_config = {
        "input_size": 32,
        "hidden_sizes": [64, 32],
        "value_output_size": 1,
    }

    key = jax.random.PRNGKey(0)
    key, kp = jax.random.split(key)
    params = init_params(
        kp,
        network_config["input_size"],
        network_config["hidden_sizes"],
        network_config["value_output_size"],
    )
    w1, b1, w2, b2, w3, b3 = params

    # Case 1: ragged batch -> padding + multi-step grid (2 steps here).
    key, kx = jax.random.split(key)
    x_big = jax.random.normal(kx, (200, network_config["input_size"]),
                              jnp.float32)
    out_big = jax.block_until_ready(value_network_forward(x_big, *params))
    ref_big = reference_forward(x_big, *params)
    assert out_big.shape == (200, network_config["value_output_size"])
    assert jnp.allclose(out_big, ref_big, atol=1e-4, rtol=1e-4), \
        "mismatch vs reference (big batch)"

    # Case 2: tiny batch (single tile).
    key, kx2 = jax.random.split(key)
    x_small = jax.random.normal(kx2, (8, network_config["input_size"]),
                                jnp.float32)
    out_small = jax.block_until_ready(value_network_forward(x_small, *params))
    ref_small = reference_forward(x_small, *params)
    assert out_small.shape == (8, network_config["value_output_size"])
    assert jnp.allclose(out_small, ref_small, atol=1e-4, rtol=1e-4), \
        "mismatch vs reference (small batch)"

    # Case 3: bf16-streamed x (halves the dominant HBM read); math stays f32.
    out_bf16 = jax.block_until_ready(
        value_network_forward(x_big, *params, stream_dtype=jnp.bfloat16))
    assert jnp.allclose(out_bf16, ref_big, atol=5e-2, rtol=0.0), \
        "mismatch vs reference (bf16-streamed x)"

    print("KERNEL_OK")
</pallas_src>

<mosaic_0001>
module attributes {stable_mosaic.version = 11 : i64} {
  func.func @_value_net_kernel(%arg0: i32, %arg1: memref<32x128xf32, #tpu.memory_space<vmem>>, %arg2: memref<64x32xf32, #tpu.memory_space<vmem>>, %arg3: memref<64x1xf32, #tpu.memory_space<vmem>>, %arg4: memref<32x64xf32, #tpu.memory_space<vmem>>, %arg5: memref<32x1xf32, #tpu.memory_space<vmem>>, %arg6: memref<32x1xf32, #tpu.memory_space<vmem>>, %arg7: memref<1x1xf32, #tpu.memory_space<vmem>>, %arg8: memref<1x128xf32, #tpu.memory_space<vmem>>) attributes {dimension_semantics = [#tpu.dimension_semantics<parallel>], iteration_bounds = array<i64: 2>, scalar_prefetch = 0 : i64, scratch_operands = 0 : i64, tpu.core_type = #tpu.core_type<tc>, window_params = [{transform_indices = @transform_0, window_bounds = array<i64: 32, 128>}, {pipeline_mode = #tpu.pipeline_mode<synchronous>, transform_indices = @transform_1, window_bounds = array<i64: 64, 32>}, {pipeline_mode = #tpu.pipeline_mode<synchronous>, transform_indices = @transform_2, window_bounds = array<i64: 64, 1>}, {pipeline_mode = #tpu.pipeline_mode<synchronous>, transform_indices = @transform_3, window_bounds = array<i64: 32, 64>}, {pipeline_mode = #tpu.pipeline_mode<synchronous>, transform_indices = @transform_4, window_bounds = array<i64: 32, 1>}, {pipeline_mode = #tpu.pipeline_mode<synchronous>, transform_indices = @transform_5, window_bounds = array<i64: 32, 1>}, {pipeline_mode = #tpu.pipeline_mode<synchronous>, transform_indices = @transform_6, window_bounds = array<i64: 1, 1>}, {transform_indices = @transform_7, window_bounds = array<i64: 1, 128>}]} {
    %c0 = arith.constant 0 : index
    %c0_0 = arith.constant 0 : index
    %0 = vector.load %arg1[%c0, %c0_0] : memref<32x128xf32, #tpu.memory_space<vmem>>, vector<32x128xf32>
    %c0_1 = arith.constant 0 : index
    %c0_2 = arith.constant 0 : index
    %1 = vector.load %arg2[%c0_1, %c0_2] : memref<64x32xf32, #tpu.memory_space<vmem>>, vector<64x32xf32>
    %cst = arith.constant dense<0.000000e+00> : vector<64x128xf32>
    %2 = tpu.matmul %1, %0, %cst {dimension_numbers = #tpu.dot_dimension_numbers<[1], [0], [0], [1], [0, 0, 1, 1], [], []>} : vector<64x32xf32>, vector<32x128xf32>, vector<64x128xf32> -> vector<64x128xf32>
    %c0_3 = arith.constant 0 : index
    %c0_4 = arith.constant 0 : index
    %3 = vector.load %arg3[%c0_3, %c0_4] : memref<64x1xf32, #tpu.memory_space<vmem>>, vector<64x1xf32>
    %4 = vector.broadcast %3 : vector<64x1xf32> to vector<64x128xf32>
    %5 = arith.addf %2, %4 : vector<64x128xf32>
    %cst_5 = arith.constant 0.000000e+00 : f32
    %6 = vector.broadcast %cst_5 : f32 to vector<64x128xf32>
    %7 = arith.maximumf %5, %6 : vector<64x128xf32>
    %c0_6 = arith.constant 0 : index
    %c0_7 = arith.constant 0 : index
    %8 = vector.load %arg4[%c0_6, %c0_7] : memref<32x64xf32, #tpu.memory_space<vmem>>, vector<32x64xf32>
    %cst_8 = arith.constant dense<0.000000e+00> : vector<32x128xf32>
    %9 = tpu.matmul %8, %7, %cst_8 {dimension_numbers = #tpu.dot_dimension_numbers<[1], [0], [0], [1], [0, 0, 1, 1], [], []>} : vector<32x64xf32>, vector<64x128xf32>, vector<32x128xf32> -> vector<32x128xf32>
    %c0_9 = arith.constant 0 : index
    %c0_10 = arith.constant 0 : index
    %10 = vector.load %arg5[%c0_9, %c0_10] : memref<32x1xf32, #tpu.memory_space<vmem>>, vector<32x1xf32>
    %11 = vector.broadcast %10 : vector<32x1xf32> to vector<32x128xf32>
    %12 = arith.addf %9, %11 : vector<32x128xf32>
    %cst_11 = arith.constant 0.000000e+00 : f32
    %13 = vector.broadcast %cst_11 : f32 to vector<32x128xf32>
    %14 = arith.maximumf %12, %13 : vector<32x128xf32>
    %c0_12 = arith.constant 0 : index
    %c0_13 = arith.constant 0 : index
    %15 = vector.load %arg6[%c0_12, %c0_13] : memref<32x1xf32, #tpu.memory_space<vmem>>, vector<32x1xf32>
    %16 = vector.broadcast %15 : vector<32x1xf32> to vector<32x128xf32>
    %17 = arith.mulf %14, %16 : vector<32x128xf32>
    %cst_14 = arith.constant dense<0.000000e+00> : vector<128xf32>
    %18 = vector.multi_reduction <add>, %17, %cst_14 [0] : vector<32x128xf32> to vector<128xf32>
    %19 = vector.shape_cast %18 : vector<128xf32> to vector<1x128xf32>
    %c0_15 = arith.constant 0 : index
    %c0_16 = arith.constant 0 : index
    %20 = vector.load %arg7[%c0_15, %c0_16] : memref<1x1xf32, #tpu.memory_space<vmem>>, vector<1x1xf32>
    %21 = vector.broadcast %20 : vector<1x1xf32> to vector<1x128xf32>
    %22 = arith.addf %19, %21 : vector<1x128xf32>
    %23 = math.tanh %22 : vector<1x128xf32>
    %c0_17 = arith.constant 0 : index
    %c0_18 = arith.constant 0 : index
    %24 = vector.load %arg8[%c0_17, %c0_18] : memref<1x128xf32, #tpu.memory_space<vmem>>, vector<1x128xf32>
    tpu.vector_store %arg8[%c0_17, %c0_18], %23 {strides = array<i32>} : memref<1x128xf32, #tpu.memory_space<vmem>>, vector<1x128xf32>,
    return
  }
  func.func @transform_0(%arg0: i32) -> (i32, i32) {
    %c0_i32 = arith.constant 0 : i32
    %c0_i32_0 = arith.constant 0 : i32
    return %c0_i32, %arg0 : i32, i32
  }
  func.func @transform_1(%arg0: i32) -> (i32, i32) {
    %c0_i32 = arith.constant 0 : i32
    %c0_i32_0 = arith.constant 0 : i32
    %c0_i32_1 = arith.constant 0 : i32
    return %c0_i32, %c0_i32_0 : i32, i32
  }
  func.func @transform_2(%arg0: i32) -> (i32, i32) {
    %c0_i32 = arith.constant 0 : i32
    %c0_i32_0 = arith.constant 0 : i32
    %c0_i32_1 = arith.constant 0 : i32
    return %c0_i32, %c0_i32_0 : i32, i32
  }
  func.func @transform_3(%arg0: i32) -> (i32, i32) {
    %c0_i32 = arith.constant 0 : i32
    %c0_i32_0 = arith.constant 0 : i32
    %c0_i32_1 = arith.constant 0 : i32
    return %c0_i32, %c0_i32_0 : i32, i32
  }
  func.func @transform_4(%arg0: i32) -> (i32, i32) {
    %c0_i32 = arith.constant 0 : i32
    %c0_i32_0 = arith.constant 0 : i32
    %c0_i32_1 = arith.constant 0 : i32
    return %c0_i32, %c0_i32_0 : i32, i32
  }
  func.func @transform_5(%arg0: i32) -> (i32, i32) {
    %c0_i32 = arith.constant 0 : i32
    %c0_i32_0 = arith.constant 0 : i32
    %c0_i32_1 = arith.constant 0 : i32
    return %c0_i32, %c0_i32_0 : i32, i32
  }
  func.func @transform_6(%arg0: i32) -> (i32, i32) {
    %c0_i32 = arith.constant 0 : i32
    %c0_i32_0 = arith.constant 0 : i32
    %c0_i32_1 = arith.constant 0 : i32
    return %c0_i32, %c0_i32_0 : i32, i32
  }
  func.func @transform_7(%arg0: i32) -> (i32, i32) {
    %c0_i32 = arith.constant 0 : i32
    %c0_i32_0 = arith.constant 0 : i32
    return %c0_i32, %arg0 : i32, i32
  }
}

</mosaic_0001>

<llo_original>
// kernel: value_network_forward.1
$region0: #{value_network_forward.1}
  #allocation0 [shape = 'u32[]', space=smem, size = 0x4, offset = 0x4, fixed_abs, tag = 'smem constant byte address 0x4 - core index']
  #allocation1 [shape = 'u32[144,128]{1,0:T(1,128)}', space=vmem, size = 0x12000, scoped, tag = 'internal scratch']
  #allocation2 [shape = 'f32[1,1]{1,0:T(1,128)S(1)}', space=vmem, size = 0x200, scoped, tag = 'scoped memory for value_network_forward.1']
  %s0 = inlined_call_operand.vmem [shape: f32[32,256], index: 0, kind: input, shape index: {}]
  %s1 = inlined_call_operand.vmem [shape: f32[64,32], index: 1, kind: input, shape index: {}]
  %s2 = inlined_call_operand.vmem [shape: f32[64,1], index: 2, kind: input, shape index: {}]
  %s3 = inlined_call_operand.vmem [shape: f32[32,64], index: 3, kind: input, shape index: {}]
  %s4 = inlined_call_operand.vmem [shape: f32[32,1], index: 4, kind: input, shape index: {}]
  %s5 = inlined_call_operand.vmem [shape: f32[32,1], index: 5, kind: input, shape index: {}]
  %s6 = inlined_call_operand.<no memory space> [shape: f32[1,1], index: 6, kind: input, shape index: {}]
  %s7 = inlined_call_operand.vmem [shape: f32[1,256], index: 7, kind: output, shape index: {}]
  %s8 = sld [smem:[#allocation0]]
  $region99: #{value_network_forward.1} parent=0
    _
  %s10 = ssub.s32 1, %s8
  %s11 = scalar_select 0, %s10, %s8
  %v12 = vstv %s6
  %13 = vst [vmem:[#allocation2] sm:$0x1] %v12
  $region1: #{value_network_forward.1} parent=0
    #allocation3 [shape = 'u8[32768]{0}', space=vmem, size = 0x8000, scoped, tag = 'input window, operand 0']
    loop: start=0, step=1, limit=4
    $region2: #{value_network_forward.1} parent=1 // loop_pre_header
      _
    $region3: #{value_network_forward.1} parent=1 // loop_header
      %s15 = sphi 0, %s19
      %p16 = scmp.ge.s32.totalorder %s15, 4
      %s25 = sphi 0, %s27
      %s28 = sphi 0, %s25
      %s29 = sphi 0, %s28
      %s45 = sphi 0, %s29
      %s49 = sphi 0, %s49
      %s51 = sphi 0, %s49
      %s52 = sphi 0, %s51
      %s66 = sphi 0, %s52
      %s70 = sphi 0, %s70
      %s72 = sphi 0, %s70
      %s73 = sphi 0, %s72
      %s87 = sphi 0, %s73
      %s91 = sphi 0, %s91
      %s93 = sphi 0, %s91
      %s94 = sphi 0, %s93
      %s108 = sphi 0, %s94
      %s112 = sphi 0, %s112
      %s114 = sphi 0, %s112
      %s115 = sphi 0, %s114
      %s129 = sphi 0, %s115
      %s133 = sphi 0, %s133
      %s135 = sphi 0, %s133
      %s136 = sphi 0, %s135
      %s150 = sphi 0, %s136
      %s154 = sphi 0, %s154
      %s156 = sphi 0, %s154
      %s157 = sphi 0, %s156
      %s171 = sphi 0, %s157
      %s177 = sphi 0, %s179
      %s180 = sphi 0, %s177
      %s181 = sphi 0, %s180
      %s197 = sphi 0, %s181
    $region4: #{value_network_forward.1} parent=1 // loop_header_branch
      %18 = sbr.rel (%p16) target = $region8
    $region5: #{value_network_forward.1} parent=1 // loop_body
      %s20 = ssub.s32 %s15, 1
      %s21 = ssub.s32 %s15, 2
      %s22 = sadd.s32 %s15, 1
      %s23 = ssub.s32 %s15, %s22
      %p24 = scmp.eq.s32.totalorder %s23, 0
      %s26 = sadd.s32 %s25, 1
      %s27 = scalar_select %p24, %s25, %s26
      %p30 = pneg %p24
      %p31 = scmp.eq.s32.totalorder %s15, 1
      %p32 = por %p30, %p31
      %p33 = scmp.ne.s32.totalorder %s25, %s28
      %p34 = scmp.eq.s32.totalorder %s15, 0
      %p35 = por %p33, %p34
      %p36 = scmp.ne.s32.totalorder %s25, %s28
      %p37 = scmp.eq.s32.totalorder %s20, 1
      %p38 = por %p36, %p37
      %p39 = scmp.ne.s32.totalorder %s28, %s29
      %p40 = scmp.eq.s32.totalorder %s20, 0
      %p41 = por %p39, %p40
      %p42 = scmp.ne.s32.totalorder %s28, %s29
      %p43 = scmp.eq.s32.totalorder %s21, 1
      %p44 = por %p42, %p43
      %p46 = scmp.ne.s32.totalorder %s29, %s45
      %p47 = scmp.eq.s32.totalorder %s21, 0
      %p48 = por %p46, %p47
      %s50 = sadd.s32 %s49, 1
      %p53 = scmp.eq.s32.totalorder %s15, 1
      %p54 = scmp.ne.s32.totalorder %s49, %s51
      %p55 = scmp.eq.s32.totalorder %s15, 0
      %p56 = por %p54, %p55
      %p57 = scmp.ne.s32.totalorder %s49, %s51
      %p58 = scmp.eq.s32.totalorder %s20, 1
      %p59 = por %p57, %p58
      %p60 = scmp.ne.s32.totalorder %s51, %s52
      %p61 = scmp.eq.s32.totalorder %s20, 0
      %p62 = por %p60, %p61
      %p63 = scmp.ne.s32.totalorder %s51, %s52
      %p64 = scmp.eq.s32.totalorder %s21, 1
      %p65 = por %p63, %p64
      %p67 = scmp.ne.s32.totalorder %s52, %s66
      %p68 = scmp.eq.s32.totalorder %s21, 0
      %p69 = por %p67, %p68
      %s71 = sadd.s32 %s70, 1
      %p74 = scmp.eq.s32.totalorder %s15, 1
      %p75 = scmp.ne.s32.totalorder %s70, %s72
      %p76 = scmp.eq.s32.totalorder %s15, 0
      %p77 = por %p75, %p76
      %p78 = scmp.ne.s32.totalorder %s70, %s72
      %p79 = scmp.eq.s32.totalorder %s20, 1
      %p80 = por %p78, %p79
      %p81 = scmp.ne.s32.totalorder %s72, %s73
      %p82 = scmp.eq.s32.totalorder %s20, 0
      %p83 = por %p81, %p82
      %p84 = scmp.ne.s32.totalorder %s72, %s73
      %p85 = scmp.eq.s32.totalorder %s21, 1
      %p86 = por %p84, %p85
      %p88 = scmp.ne.s32.totalorder %s73, %s87
      %p89 = scmp.eq.s32.totalorder %s21, 0
      %p90 = por %p88, %p89
      %s92 = sadd.s32 %s91, 1
      %p95 = scmp.eq.s32.totalorder %s15, 1
      %p96 = scmp.ne.s32.totalorder %s91, %s93
      %p97 = scmp.eq.s32.totalorder %s15, 0
      %p98 = por %p96, %p97
      %p99 = scmp.ne.s32.totalorder %s91, %s93
      %p100 = scmp.eq.s32.totalorder %s20, 1
      %p101 = por %p99, %p100
      %p102 = scmp.ne.s32.totalorder %s93, %s94
      %p103 = scmp.eq.s32.totalorder %s20, 0
      %p104 = por %p102, %p103
      %p105 = scmp.ne.s32.totalorder %s93, %s94
      %p106 = scmp.eq.s32.totalorder %s21, 1
      %p107 = por %p105, %p106
      %p109 = scmp.ne.s32.totalorder %s94, %s108
      %p110 = scmp.eq.s32.totalorder %s21, 0
      %p111 = por %p109, %p110
      %s113 = sadd.s32 %s112, 1
      %p116 = scmp.eq.s32.totalorder %s15, 1
      %p117 = scmp.ne.s32.totalorder %s112, %s114
      %p118 = scmp.eq.s32.totalorder %s15, 0
      %p119 = por %p117, %p118
      %p120 = scmp.ne.s32.totalorder %s112, %s114
      %p121 = scmp.eq.s32.totalorder %s20, 1
      %p122 = por %p120, %p121
      %p123 = scmp.ne.s32.totalorder %s114, %s115
      %p124 = scmp.eq.s32.totalorder %s20, 0
      %p125 = por %p123, %p124
      %p126 = scmp.ne.s32.totalorder %s114, %s115
      %p127 = scmp.eq.s32.totalorder %s21, 1
      %p128 = por %p126, %p127
      %p130 = scmp.ne.s32.totalorder %s115, %s129
      %p131 = scmp.eq.s32.totalorder %s21, 0
      %p132 = por %p130, %p131
      %s134 = sadd.s32 %s133, 1
      %p137 = scmp.eq.s32.totalorder %s15, 1
      %p138 = scmp.ne.s32.totalorder %s133, %s135
      %p139 = scmp.eq.s32.totalorder %s15, 0
      %p140 = por %p138, %p139
      %p141 = scmp.ne.s32.totalorder %s133, %s135
      %p142 = scmp.eq.s32.totalorder %s20, 1
      %p143 = por %p141, %p142
      %p144 = scmp.ne.s32.totalorder %s135, %s136
      %p145 = scmp.eq.s32.totalorder %s20, 0
      %p146 = por %p144, %p145
      %p147 = scmp.ne.s32.totalorder %s135, %s136
      %p148 = scmp.eq.s32.totalorder %s21, 1
      %p149 = por %p147, %p148
      %p151 = scmp.ne.s32.totalorder %s136, %s150
      %p152 = scmp.eq.s32.totalorder %s21, 0
      %p153 = por %p151, %p152
      %s155 = sadd.s32 %s154, 1
      %p158 = scmp.eq.s32.totalorder %s15, 1
      %p159 = scmp.ne.s32.totalorder %s154, %s156
      %p160 = scmp.eq.s32.totalorder %s15, 0
      %p161 = por %p159, %p160
      %p162 = scmp.ne.s32.totalorder %s154, %s156
      %p163 = scmp.eq.s32.totalorder %s20, 1
      %p164 = por %p162, %p163
      %p165 = scmp.ne.s32.totalorder %s156, %s157
      %p166 = scmp.eq.s32.totalorder %s20, 0
      %p167 = por %p165, %p166
      %p168 = scmp.ne.s32.totalorder %s156, %s157
      %p169 = scmp.eq.s32.totalorder %s21, 1
      %p170 = por %p168, %p169
      %p172 = scmp.ne.s32.totalorder %s157, %s171
      %p173 = scmp.eq.s32.totalorder %s21, 0
      %p174 = por %p172, %p173
      %s175 = ssub.s32 %s15, %s22
      %p176 = scmp.eq.s32.totalorder %s175, 0
      %s178 = sadd.s32 %s177, 1
      %s179 = scalar_select %p176, %s177, %s178
      %p182 = pneg %p176
      %p183 = scmp.eq.s32.totalorder %s15, 1
      %p184 = por %p182, %p183
      %p185 = scmp.ne.s32.totalorder %s177, %s180
      %p186 = scmp.eq.s32.totalorder %s15, 0
      %p187 = por %p185, %p186
      %p188 = scmp.ne.s32.totalorder %s177, %s180
      %p189 = scmp.eq.s32.totalorder %s20, 1
      %p190 = por %p188, %p189
      %p191 = scmp.ne.s32.totalorder %s180, %s181
      %p192 = scmp.eq.s32.totalorder %s20, 0
      %p193 = por %p191, %p192
      %p194 = scmp.ne.s32.totalorder %s180, %s181
      %p195 = scmp.eq.s32.totalorder %s21, 1
      %p196 = por %p194, %p195
      %p198 = scmp.ne.s32.totalorder %s181, %s197
      %p199 = scmp.eq.s32.totalorder %s21, 0
      %p200 = por %p198, %p199
      %p201 = scmp.le.s32.totalorder 1, %s15
      %p202 = scmp.lt.s32.totalorder %s15, 3
      %p203 = pnand %p201, %p202
      %p204 = pneg %p203
      // Predicated region
      $region9: #{value_network_forward.1} parent=5 // pred_check
        _
      $region10: #{value_network_forward.1} parent=5 // pred_check_branch
        %206 = sbr.rel (%p203) target = $region12
      $region11: #{value_network_forward.1} parent=5 // pred_region
        %s207 = ssub.s32 %s15, 1
        // Predicated region
        $region13: #{value_network_forward.1} parent=11 // pred_check
          %p208 = pneg %p62
        $region14: #{value_network_forward.1} parent=11 // pred_check_branch
          %210 = sbr.rel (%p208) target = $region16
        $region15: #{value_network_forward.1} parent=11 // pred_region
          _
        $region16: #{value_network_forward.1} parent=11 // pred_fallthru
          _
        // Predicated region
        $region17: #{value_network_forward.1} parent=11 // pred_check
          %p211 = pneg %p83
        $region18: #{value_network_forward.1} parent=11 // pred_check_branch
          %213 = sbr.rel (%p211) target = $region20
        $region19: #{value_network_forward.1} parent=11 // pred_region
          _
        $region20: #{value_network_forward.1} parent=11 // pred_fallthru
          _
        // Predicated region
        $region21: #{value_network_forward.1} parent=11 // pred_check
          %p214 = pneg %p104
        $region22: #{value_network_forward.1} parent=11 // pred_check_branch
          %216 = sbr.rel (%p214) target = $region24
        $region23: #{value_network_forward.1} parent=11 // pred_region
          _
        $region24: #{value_network_forward.1} parent=11 // pred_fallthru
          _
        // Predicated region
        $region25: #{value_network_forward.1} parent=11 // pred_check
          %p217 = pneg %p125
        $region26: #{value_network_forward.1} parent=11 // pred_check_branch
          %219 = sbr.rel (%p217) target = $region28
        $region27: #{value_network_forward.1} parent=11 // pred_region
          _
        $region28: #{value_network_forward.1} parent=11 // pred_fallthru
          _
        // Predicated region
        $region29: #{value_network_forward.1} parent=11 // pred_check
          %p220 = pneg %p146
        $region30: #{value_network_forward.1} parent=11 // pred_check_branch
          %222 = sbr.rel (%p220) target = $region32
        $region31: #{value_network_forward.1} parent=11 // pred_region
          _
        $region32: #{value_network_forward.1} parent=11 // pred_fallthru
          _
        // Predicated region
        $region33: #{value_network_forward.1} parent=11 // pred_check
          %p223 = pneg %p167
        $region34: #{value_network_forward.1} parent=11 // pred_check_branch
          %225 = sbr.rel (%p223) target = $region36
        $region35: #{value_network_forward.1} parent=11 // pred_region
          _
        $region36: #{value_network_forward.1} parent=11 // pred_fallthru
          _
      $region12: #{value_network_forward.1} parent=5 // pred_fallthru
        _
      %p226 = scmp.lt.s32.totalorder %s15, 2
      // Predicated region
      $region37: #{value_network_forward.1} parent=5 // pred_check
        %p227 = pneg %p226
      $region38: #{value_network_forward.1} parent=5 // pred_check_branch
        %229 = sbr.rel (%p227) target = $region40
      $region39: #{value_network_forward.1} parent=5 // pred_region
        // Predicated region
        $region41: #{value_network_forward.1} parent=39 // pred_check
          %p230 = pneg %p35
        $region42: #{value_network_forward.1} parent=39 // pred_check_branch
          %232 = sbr.rel (%p230) target = $region44
        $region43: #{value_network_forward.1} parent=39 // pred_region
          %s233 = sand.u32 %s25, 1
          %s234 = sand.u32 %s25, 1
          %s235 = smul.addr %s234, 32
          %s236 = scalar_lea.vmem [#allocation3], %s235
          %s237 = smul.addr %s15, 8
          %s238 = scalar_lea.vmem %s0, %s237
          // Predicated region
          $region45: #{value_network_forward.1} parent=43 // pred_check
            _
          $region46: #{value_network_forward.1} parent=43 // pred_check_branch
            %240 = sbr.rel (0) target = $region48
          $region47: #{value_network_forward.1} parent=43 // pred_region
            // Predicated region
            $region49: #{value_network_forward.1} parent=47 // pred_check
              _
            $region50: #{value_network_forward.1} parent=47 // pred_check_branch
              %242 = sbr.rel (0) target = $region52
            $region51: #{value_network_forward.1} parent=47 // pred_region
              // Predicated region
              $region64: #{value_network_forward.1} parent=51 // pred_check
                _
              $region65: #{value_network_forward.1} parent=51 // pred_check_branch
                %263 = sbr.rel (0) target = $region67
              $region66: #{value_network_forward.1} parent=51 // pred_region
                loop: start=0, step=1, limit=1
                $region68: #{value_network_forward.1} parent=66 // loop_pre_header
                  _
                $region69: #{value_network_forward.1} parent=66 // loop_header
                  %s265 = sphi 0, %s269
                  %p266 = scmp.ge.s32.totalorder %s265, 1
                  %s270 = sphi %s238, %s238
                  %s271 = sphi %s236, %s236
                $region70: #{value_network_forward.1} parent=66 // loop_header_branch
                  %268 = sbr.rel (%p266) target = $region74
                $region71: #{value_network_forward.1} parent=66 // loop_body
                  %v272 = vld [vmem:[%s270] sm:$0xff]
                  %273 = vst [vmem:[%s271] sm:$0xff] %v272
                  %v274 = vld [vmem:[%s270 + $0x10] sm:$0xff]
                  %275 = vst [vmem:[%s271 + $0x8] sm:$0xff] %v274
                  %v276 = vld [vmem:[%s270 + $0x20] sm:$0xff]
                  %277 = vst [vmem:[%s271 + $0x10] sm:$0xff] %v276
                  %v278 = vld [vmem:[%s270 + $0x30] sm:$0xff]
                  %279 = vst [vmem:[%s271 + $0x18] sm:$0xff] %v278
                $region72: #{value_network_forward.1} parent=66 // loop_footer
                  %s269 = sadd.s32 1, %s265
                $region73: #{value_network_forward.1} parent=66 // loop_footer_branch
                  %264 = sbr.rel target = $region69
                $region74: #{value_network_forward.1} parent=66 // loop_exit
                  _
              $region67: #{value_network_forward.1} parent=51 // pred_fallthru
                _
              // Predicated region
              $region75: #{value_network_forward.1} parent=51 // pred_check
                _
              $region76: #{value_network_forward.1} parent=51 // pred_check_branch
                %281 = sbr.rel target = $region78
              $region77: #{value_network_forward.1} parent=51 // pred_region
                _
              $region78: #{value_network_forward.1} parent=51 // pred_fallthru
                _
            $region52: #{value_network_forward.1} parent=47 // pred_fallthru
              _
            // Predicated region
            $region53: #{value_network_forward.1} parent=47 // pred_check
              _
            $region54: #{value_network_forward.1} parent=47 // pred_check_branch
              %244 = sbr.rel target = $region56
            $region55: #{value_network_forward.1} parent=47 // pred_region
              loop: start=0, step=1, limit=1
              $region57: #{value_network_forward.1} parent=55 // loop_pre_header
                _
              $region58: #{value_network_forward.1} parent=55 // loop_header
                %s247 = sphi 0, %s251
                %p248 = scmp.ge.s32.totalorder %s247, 1
                %s252 = sphi %s238, %s238
                %s253 = sphi %s236, %s236
              $region59: #{value_network_forward.1} parent=55 // loop_header_branch
                %250 = sbr.rel (%p248) target = $region63
              $region60: #{value_network_forward.1} parent=55 // loop_body
                %v254 = vld [vmem:[%s252] sm:$0xff]
                %255 = vst [vmem:[%s253] sm:$0xff] %v254
                %v256 = vld [vmem:[%s252 + $0x10] sm:$0xff]
                %257 = vst [vmem:[%s253 + $0x8] sm:$0xff] %v256
                %v258 = vld [vmem:[%s252 + $0x20] sm:$0xff]
                %259 = vst [vmem:[%s253 + $0x10] sm:$0xff] %v258
                %v260 = vld [vmem:[%s252 + $0x30] sm:$0xff]
                %261 = vst [vmem:[%s253 + $0x18] sm:$0xff] %v260
              $region61: #{value_network_forward.1} parent=55 // loop_footer
                %s251 = sadd.s32 1, %s247
              $region62: #{value_network_forward.1} parent=55 // loop_footer_branch
                %246 = sbr.rel target = $region58
              $region63: #{value_network_forward.1} parent=55 // loop_exit
                _
            $region56: #{value_network_forward.1} parent=47 // pred_fallthru
              _
          $region48: #{value_network_forward.1} parent=43 // pred_fallthru
            _
          %282 = vnop
        $region44: #{value_network_forward.1} parent=39 // pred_fallthru
          _
      $region40: #{value_network_forward.1} parent=5 // pred_fallthru
        _
      %p283 = scmp.le.s32.totalorder 1, %s15
      %p284 = scmp.lt.s32.totalorder %s15, 3
      %p285 = pnand %p283, %p284
      %p286 = pneg %p285
      // Predicated region
      $region79: #{value_network_forward.1} parent=5 // pred_check
        _
      $region80: #{value_network_forward.1} parent=5 // pred_check_branch
        %288 = sbr.rel (%p285) target = $region82
      $region81: #{value_network_forward.1} parent=5 // pred_region
        %s289 = ssub.s32 %s15, 1
        %s290 = sand.u32 %s28, 1
        %s291 = sand.u32 %s28, 1
        %s292 = smul.addr %s291, 32
        %s293 = scalar_lea.vmem [#allocation3], %s292
        // Predicated region
        $region83: #{value_network_forward.1} parent=81 // pred_check
          %p294 = pneg %p41
        $region84: #{value_network_forward.1} parent=81 // pred_check_branch
          %296 = sbr.rel (%p294) target = $region86
        $region85: #{value_network_forward.1} parent=81 // pred_region
          _
        $region86: #{value_network_forward.1} parent=81 // pred_fallthru
          _
        %s297 = sand.u32 %s28, 1
        %s298 = sand.u32 %s28, 1
        %s299 = smul.addr %s298, 32
        %s300 = scalar_lea.vmem [#allocation3], %s299
        %p301 = pneg %p41
        %p302 = pneg %p38
        %p303 = pneg %p62
        %p304 = pneg %p59
        %p305 = pneg %p83
        %p306 = pneg %p80
        %p307 = pneg %p104
        %p308 = pneg %p101
        %p309 = pneg %p125
        %p310 = pneg %p122
        %p311 = pneg %p146
        %p312 = pneg %p143
        %p313 = pneg %p167
        %p314 = pneg %p164
        %p315 = pneg %p193
        %p316 = pneg %p190
        %p317 = scmp.lt.s32.totalorder %s20, 1
        %s318 = scalar_select %p317, %s20, 1
        %s319 = scalar_lea.vmem %s7, %s318
        %p320 = scmp.lt.s32.totalorder %s20, 1
        %s321 = scalar_select %p320, %s20, 1
        %s322 = scalar_lea.vmem %s7, %s321
        %v323 = vld [vmem:[%s293] sm:$0xff]
        %v324 = vld [vmem:[%s293 + $0x8] sm:$0xff]
        %v325 = vld [vmem:[%s293 + $0x10] sm:$0xff]
        %v326 = vld [vmem:[%s293 + $0x18] sm:$0xff]
        %v327 = vld [vmem:[%s1] sm:$0xff]
        %v328 = vld [vmem:[%s1 + $0x8] sm:$0xff]
        %v329 = vld [vmem:[%s1 + $0x10] sm:$0xff]
        %v330 = vld [vmem:[%s1 + $0x18] sm:$0xff]
        %v331 = vld [vmem:[%s1 + $0x20] sm:$0xff]
        %v332 = vld [vmem:[%s1 + $0x28] sm:$0xff]
        %v333 = vld [vmem:[%s1 + $0x30] sm:$0xff]
        %v334 = vld [vmem:[%s1 + $0x38] sm:$0xff]
        %v335 = vld [vmem:[%s2] sm:$0xff]
        %v336 = vld [vmem:[%s2 + $0x8] sm:$0xff]
        %v337 = vld [vmem:[%s2 + $0x10] sm:$0xff]
        %v338 = vld [vmem:[%s2 + $0x18] sm:$0xff]
        %v339 = vld [vmem:[%s2 + $0x20] sm:$0xff]
        %v340 = vld [vmem:[%s2 + $0x28] sm:$0xff]
        %v341 = vld [vmem:[%s2 + $0x30] sm:$0xff]
        %v342 = vld [vmem:[%s2 + $0x38] sm:$0xff]
        %344 = vset.pattern.permute.xlu0 0
        %345 = vperm.xlu0 %344, %v335
        %v346 = vpop.permute.xlu0 %345
        %349 = vset.pattern.permute.xlu0 0
        %350 = vperm.xlu0 %349, %v336
        %v351 = vpop.permute.xlu0 %350
        %354 = vset.pattern.permute.xlu0 0
        %355 = vperm.xlu0 %354, %v337
        %v356 = vpop.permute.xlu0 %355
        %359 = vset.pattern.permute.xlu0 0
        %360 = vperm.xlu0 %359, %v338
        %v361 = vpop.permute.xlu0 %360
        %364 = vset.pattern.permute.xlu0 0
        %365 = vperm.xlu0 %364, %v339
        %v366 = vpop.permute.xlu0 %365
        %369 = vset.pattern.permute.xlu0 0
        %370 = vperm.xlu0 %369, %v340
        %v371 = vpop.permute.xlu0 %370
        %374 = vset.pattern.permute.xlu0 0
        %375 = vperm.xlu0 %374, %v341
        %v376 = vpop.permute.xlu0 %375
        %379 = vset.pattern.permute.xlu0 0
        %380 = vperm.xlu0 %379, %v342
        %v381 = vpop.permute.xlu0 %380
        %vm383 = vcmask 261120
        %v385 = vsel %vm383, %v327, 0
        %v388 = vsel %vm383, %v328, 0
        %v391 = vsel %vm383, %v329, 0
        %v394 = vsel %vm383, %v330, 0
        %v397 = vsel %vm383, %v331, 0
        %v400 = vsel %vm383, %v332, 0
        %v403 = vsel %vm383, %v333, 0
        %v406 = vsel %vm383, %v334, 0
        %408 = vmatprep.subr.mxu0 0.0
        %409 = vmatpush1.msra.mxu0 %v323
        %410 = vmatprep.subr.mxu0 0.0
        %411 = vmatpush1.msra.mxu0 %v324
        %412 = vmatprep.subr.mxu0 0.0
        %413 = vmatpush1.msra.mxu0 %v325
        %414 = vmatprep.subr.mxu0 0.0
        %415 = vmatpush1.msra.mxu0 %v326
        %416 = vmatprep.subr.mxu0 0.0
        %417 = vmatpush1.msra.mxu0 0.0
        %418 = vmatprep.subr.mxu0 0.0
        %419 = vmatpush1.msra.mxu0 0.0
        %420 = vmatprep.subr.mxu0 0.0
        %421 = vmatpush1.msra.mxu0 0.0
        %422 = vmatprep.subr.mxu0 0.0
        %423 = vmatpush1.msra.mxu0 0.0
        %424 = vmatprep.subr.mxu0 0.0
        %425 = vmatpush1.msra.mxu0 0.0
        %426 = vmatprep.subr.mxu0 0.0
        %427 = vmatpush1.msra.mxu0 0.0
        %428 = vmatprep.subr.mxu0 0.0
        %429 = vmatpush1.msra.mxu0 0.0
        %430 = vmatprep.subr.mxu0 0.0
        %431 = vmatpush1.msra.mxu0 0.0
        %432 = vmatprep.subr.mxu0 0.0
        %433 = vmatpush1.msra.mxu0 0.0
        %434 = vmatprep.subr.mxu0 0.0
        %435 = vmatpush1.msra.mxu0 0.0
        %436 = vmatprep.subr.mxu0 0.0
        %437 = vmatpush1.msra.mxu0 0.0
        %438 = vmatprep.subr.mxu0 0.0
        %439 = vmatpush1.msra.mxu0 0.0
        %440 = vmatprep.subr.mxu0 0.0
        %441 = vmatpush1.msra.mxu0 0.0
        %442 = vmatprep.subr.mxu0 0.0
        %443 = vmatpush1.msra.mxu0 0.0
        %444 = vmatprep.subr.mxu0 0.0
        %445 = vmatpush1.msra.mxu0 0.0
        %446 = vmatprep.subr.mxu0 0.0
        %447 = vmatpush1.msra.mxu0 0.0
        %448 = vmatprep.subr.mxu0 0.0
        %449 = vmatpush1.msra.mxu0 0.0
        %450 = vmatprep.subr.mxu0 0.0
        %451 = vmatpush1.msra.mxu0 0.0
        %452 = vmatprep.subr.mxu0 0.0
        %453 = vmatpush1.msra.mxu0 0.0
        %454 = vmatprep.subr.mxu0 0.0
        %455 = vmatpush1.msra.mxu0 0.0
        %456 = vmatprep.subr.mxu0 0.0
        %457 = vmatpush1.msra.mxu0 0.0
        %458 = vmatprep.subr.mxu0 0.0
        %459 = vmatpush1.msra.mxu0 0.0
        %460 = vmatprep.subr.mxu0 0.0
        %461 = vmatpush1.msra.mxu0 0.0
        %462 = vmatprep.subr.mxu0 0.0
        %463 = vmatpush1.msra.mxu0 0.0
        %464 = vmatprep.subr.mxu0 0.0
        %465 = vmatpush1.msra.mxu0 0.0
        %466 = vmatprep.subr.mxu0 0.0
        %467 = vmatpush1.msra.mxu0 0.0
        %468 = vmatprep.subr.mxu0 0.0
        %469 = vmatpush1.msra.mxu0 0.0
        %470 = vmatprep.subr.mxu0 0.0
        %471 = vmatpush1.msra.mxu0 0.0
        %472 = vmatprep.mubr.f32.mxu0 0.0
        %473 = vmatmul.mubr.f32.gmra.mrb[0].mxu0 %v385
        %v474 = vpop.f32.mrb[0].mxu0
        %v475 = vadd.f32 %v346, %v474
        %v476 = vpop.f32.mrb[0].mxu0
        %477 = vmatprep.mubr.f32.mxu0 0.0
        %478 = vmatmul.mubr.f32.gmra.mrb[0].mxu0 %v388
        %v479 = vpop.f32.mrb[0].mxu0
        %v480 = vadd.f32 %v351, %v479
        %v481 = vpop.f32.mrb[0].mxu0
        %482 = vmatprep.mubr.f32.mxu0 0.0
        %483 = vmatmul.mubr.f32.gmra.mrb[0].mxu0 %v391
        %v484 = vpop.f32.mrb[0].mxu0
        %v485 = vadd.f32 %v356, %v484
        %v486 = vpop.f32.mrb[0].mxu0
        %487 = vmatprep.mubr.f32.mxu0 0.0
        %488 = vmatmul.mubr.f32.gmra.mrb[0].mxu0 %v394
        %v489 = vpop.f32.mrb[0].mxu0
        %v490 = vadd.f32 %v361, %v489
        %v491 = vpop.f32.mrb[0].mxu0
        %492 = vmatprep.mubr.f32.mxu0 0.0
        %493 = vmatmul.mubr.f32.gmra.mrb[0].mxu0 %v397
        %v494 = vpop.f32.mrb[0].mxu0
        %v495 = vadd.f32 %v366, %v494
        %v496 = vpop.f32.mrb[0].mxu0
        %497 = vmatprep.mubr.f32.mxu0 0.0
        %498 = vmatmul.mubr.f32.gmra.mrb[0].mxu0 %v400
        %v499 = vpop.f32.mrb[0].mxu0
        %v500 = vadd.f32 %v371, %v499
        %v501 = vpop.f32.mrb[0].mxu0
        %502 = vmatprep.mubr.f32.mxu0 0.0
        %503 = vmatmul.mubr.f32.gmra.mrb[0].mxu0 %v403
        %v504 = vpop.f32.mrb[0].mxu0
        %v505 = vadd.f32 %v376, %v504
        %v506 = vpop.f32.mrb[0].mxu0
        %507 = vmatprep.mubr.f32.mxu0 0.0
        %508 = vmatmul.mubr.f32.gmra.mrb[0].mxu0 %v406
        %v509 = vpop.f32.mrb[0].mxu0
        %v510 = vadd.f32 %v381, %v509
        %v511 = vpop.f32.mrb[0].mxu0
        %512 = vdwg.mxu0
        %v513 = vmax.f32 %v475, 0.0
        %v514 = vmax.f32 %v480, 0.0
        %v515 = vmax.f32 %v485, 0.0
        %v516 = vmax.f32 %v490, 0.0
        %v517 = vmax.f32 %v495, 0.0
        %v518 = vmax.f32 %v500, 0.0
        %v519 = vmax.f32 %v505, 0.0
        %v520 = vmax.f32 %v510, 0.0
        %v521 = vld [vmem:[%s3] sm:$0xff]
        %v522 = vld [vmem:[%s3 + $0x8] sm:$0xff]
        %v523 = vld [vmem:[%s3 + $0x10] sm:$0xff]
        %v524 = vld [vmem:[%s3 + $0x18] sm:$0xff]
        %v525 = vld [vmem:[%s4] sm:$0xff]
        %v526 = vld [vmem:[%s4 + $0x8] sm:$0xff]
        %v527 = vld [vmem:[%s4 + $0x10] sm:$0xff]
        %v528 = vld [vmem:[%s4 + $0x18] sm:$0xff]
        %530 = vset.pattern.permute.xlu0 0
        %531 = vperm.xlu0 %530, %v525
        %v532 = vpop.permute.xlu0 %531
        %535 = vset.pattern.permute.xlu0 0
        %536 = vperm.xlu0 %535, %v526
        %v537 = vpop.permute.xlu0 %536
        %540 = vset.pattern.permute.xlu0 0
        %541 = vperm.xlu0 %540, %v527
        %v542 = vpop.permute.xlu0 %541
        %545 = vset.pattern.permute.xlu0 0
        %546 = vperm.xlu0 %545, %v528
        %v547 = vpop.permute.xlu0 %546
        %vm549 = vcmask 523264
        %v551 = vsel %vm549, %v521, 0
        %v554 = vsel %vm549, %v522, 0
        %v557 = vsel %vm549, %v523, 0
        %v560 = vsel %vm549, %v524, 0
        %562 = vmatprep.subr.mxu0 0.0
        %563 = vmatpush1.msra.mxu0 %v513
        %564 = vmatprep.subr.mxu0 0.0
        %565 = vmatpush1.msra.mxu0 %v514
        %566 = vmatprep.subr.mxu0 0.0
        %567 = vmatpush1.msra.mxu0 %v515
        %568 = vmatprep.subr.mxu0 0.0
        %569 = vmatpush1.msra.mxu0 %v516
        %570 = vmatprep.subr.mxu0 0.0
        %571 = vmatpush1.msra.mxu0 %v517
        %572 = vmatprep.subr.mxu0 0.0
        %573 = vmatpush1.msra.mxu0 %v518
        %574 = vmatprep.subr.mxu0 0.0
        %575 = vmatpush1.msra.mxu0 %v519
        %576 = vmatprep.subr.mxu0 0.0
        %577 = vmatpush1.msra.mxu0 %v520
        %578 = vmatprep.subr.mxu0 0.0
        %579 = vmatpush1.msra.mxu0 0.0
        %580 = vmatprep.subr.mxu0 0.0
        %581 = vmatpush1.msra.mxu0 0.0
        %582 = vmatprep.subr.mxu0 0.0
        %583 = vmatpush1.msra.mxu0 0.0
        %584 = vmatprep.subr.mxu0 0.0
        %585 = vmatpush1.msra.mxu0 0.0
        %586 = vmatprep.subr.mxu0 0.0
        %587 = vmatpush1.msra.mxu0 0.0
        %588 = vmatprep.subr.mxu0 0.0
        %589 = vmatpush1.msra.mxu0 0.0
        %590 = vmatprep.subr.mxu0 0.0
        %591 = vmatpush1.msra.mxu0 0.0
        %592 = vmatprep.subr.mxu0 0.0
        %593 = vmatpush1.msra.mxu0 0.0
        %594 = vmatprep.subr.mxu0 0.0
        %595 = vmatpush1.msra.mxu0 0.0
        %596 = vmatprep.subr.mxu0 0.0
        %597 = vmatpush1.msra.mxu0 0.0
        %598 = vmatprep.subr.mxu0 0.0
        %599 = vmatpush1.msra.mxu0 0.0
        %600 = vmatprep.subr.mxu0 0.0
        %601 = vmatpush1.msra.mxu0 0.0
        %602 = vmatprep.subr.mxu0 0.0
        %603 = vmatpush1.msra.mxu0 0.0
        %604 = vmatprep.subr.mxu0 0.0
        %605 = vmatpush1.msra.mxu0 0.0
        %606 = vmatprep.subr.mxu0 0.0
        %607 = vmatpush1.msra.mxu0 0.0
        %608 = vmatprep.subr.mxu0 0.0
        %609 = vmatpush1.msra.mxu0 0.0
        %610 = vmatprep.subr.mxu0 0.0
        %611 = vmatpush1.msra.mxu0 0.0
        %612 = vmatprep.subr.mxu0 0.0
        %613 = vmatpush1.msra.mxu0 0.0
        %614 = vmatprep.subr.mxu0 0.0
        %615 = vmatpush1.msra.mxu0 0.0
        %616 = vmatprep.subr.mxu0 0.0
        %617 = vmatpush1.msra.mxu0 0.0
        %618 = vmatprep.subr.mxu0 0.0
        %619 = vmatpush1.msra.mxu0 0.0
        %620 = vmatprep.subr.mxu0 0.0
        %621 = vmatpush1.msra.mxu0 0.0
        %622 = vmatprep.subr.mxu0 0.0
        %623 = vmatpush1.msra.mxu0 0.0
        %624 = vmatprep.subr.mxu0 0.0
        %625 = vmatpush1.msra.mxu0 0.0
        %626 = vmatprep.mubr.f32.mxu0 0.0
        %627 = vmatmul.mubr.f32.gmra.mrb[0].mxu0 %v551
        %v628 = vpop.f32.mrb[0].mxu0
        %v629 = vadd.f32 %v532, %v628
        %v630 = vpop.f32.mrb[0].mxu0
        %631 = vmatprep.mubr.f32.mxu0 0.0
        %632 = vmatmul.mubr.f32.gmra.mrb[0].mxu0 %v554
        %v633 = vpop.f32.mrb[0].mxu0
        %v634 = vadd.f32 %v537, %v633
        %v635 = vpop.f32.mrb[0].mxu0
        %636 = vmatprep.mubr.f32.mxu0 0.0
        %637 = vmatmul.mubr.f32.gmra.mrb[0].mxu0 %v557
        %v638 = vpop.f32.mrb[0].mxu0
        %v639 = vadd.f32 %v542, %v638
        %v640 = vpop.f32.mrb[0].mxu0
        %641 = vmatprep.mubr.f32.mxu0 0.0
        %642 = vmatmul.mubr.f32.gmra.mrb[0].mxu0 %v560
        %v643 = vpop.f32.mrb[0].mxu0
        %v644 = vadd.f32 %v547, %v643
        %v645 = vpop.f32.mrb[0].mxu0
        %646 = vdwg.mxu0
        %v647 = vmax.f32 %v629, 0.0
        %v648 = vmax.f32 %v634, 0.0
        %v649 = vmax.f32 %v639, 0.0
        %v650 = vmax.f32 %v644, 0.0
        %v651 = vld [vmem:[%s5] sm:$0xff]
        %v652 = vld [vmem:[%s5 + $0x8] sm:$0xff]
        %v653 = vld [vmem:[%s5 + $0x10] sm:$0xff]
        %v654 = vld [vmem:[%s5 + $0x18] sm:$0xff]
        %656 = vset.pattern.permute.xlu0 0
        %657 = vperm.xlu0 %656, %v651
        %v658 = vpop.permute.xlu0 %657
        %661 = vset.pattern.permute.xlu0 0
        %662 = vperm.xlu0 %661, %v652
        %v663 = vpop.permute.xlu0 %662
        %666 = vset.pattern.permute.xlu0 0
        %667 = vperm.xlu0 %666, %v653
        %v668 = vpop.permute.xlu0 %667
        %671 = vset.pattern.permute.xlu0 0
        %672 = vperm.xlu0 %671, %v654
        %v673 = vpop.permute.xlu0 %672
        %v675 = vmul.f32 %v647, %v658
        %v676 = vmul.f32 %v648, %v663
        %v677 = vmul.f32 %v649, %v668
        %v678 = vmul.f32 %v650, %v673
        %v679 = vadd.f32 %v675, %v676
        %v680 = vadd.f32 %v679, %v677
        %v681 = vadd.f32 %v680, %v678
        %v682 = vrot.slane %v681, 4
        %v683 = vadd.f32 %v681, %v682
        %v684 = vrot.slane %v683, 2
        %v685 = vadd.f32 %v683, %v684
        %v686 = vrot.slane %v685, 1
        %v687 = vadd.f32 %v685, %v686
        %v688 = vld [vmem:[#allocation2] sm:$0x1]
        %690 = vset.pattern.permute.xlu0 0
        %691 = vperm.xlu0 %690, %v688
        %v692 = vpop.permute.xlu0 %691
        %v694 = vlaneseq
        %v695 = vshrl.u32 %v694, 7
        %v696 = vsub.s32 0, %v695
        %v697 = vrot.slane %v692, %v696
        %v698 = vadd.f32 %v687, %v697
        %v699 = vtanh.pop %v698
        %700 = vst [vmem:[%s322] sm:$0x1] %v699
        %p701 = scmp.lt.s32.totalorder %s20, 1
        %s702 = scalar_select %p701, %s20, 1
        %s703 = scalar_lea.vmem %s7, %s702
        // Predicated region
        $region87: #{value_network_forward.1} parent=81 // pred_check
          %p704 = pneg %p190
        $region88: #{value_network_forward.1} parent=81 // pred_check_branch
          %706 = sbr.rel (%p704) target = $region90
        $region89: #{value_network_forward.1} parent=81 // pred_region
          _
        $region90: #{value_network_forward.1} parent=81 // pred_fallthru
          _
      $region82: #{value_network_forward.1} parent=5 // pred_fallthru
        _
      %p707 = scmp.le.s32.totalorder 2, %s15
      // Predicated region
      $region91: #{value_network_forward.1} parent=5 // pred_check
        %p708 = pneg %p707
      $region92: #{value_network_forward.1} parent=5 // pred_check_branch
        %710 = sbr.rel (%p708) target = $region94
      $region93: #{value_network_forward.1} parent=5 // pred_region
        %s711 = ssub.s32 %s15, 2
        // Predicated region
        $region95: #{value_network_forward.1} parent=93 // pred_check
          %p712 = pneg %p196
        $region96: #{value_network_forward.1} parent=93 // pred_check_branch
          %714 = sbr.rel (%p712) target = $region98
        $region97: #{value_network_forward.1} parent=93 // pred_region
          %p715 = scmp.lt.s32.totalorder %s21, 1
          %s716 = scalar_select %p715, %s21, 1
          %s717 = scalar_lea.vmem %s7, %s716
        $region98: #{value_network_forward.1} parent=93 // pred_fallthru
          _
      $region94: #{value_network_forward.1} parent=5 // pred_fallthru
        _
    $region6: #{value_network_forward.1} parent=1 // loop_footer
      %s19 = sadd.s32 1, %s15
    $region7: #{value_network_forward.1} parent=1 // loop_footer_branch
      %14 = sbr.rel target = $region3
    $region8: #{value_network_forward.1} parent=1 // loop_exit
      _

</llo_original>
